<compile_context>
chip_gen: v7x
topology: tpu7x:2x2x1
jax: 0.10.0
libtpu: 0.0.40
codegen_flags: <defaults>
</compile_context>

<pallas_src>
import jax
import jax.numpy as jnp
from jax.experimental import pallas as pl
from jax.experimental.pallas import tpu as pltpu


# ---------------------------------------------------------------------------
# Kernel bodies: one block of x (1, Ct, Lt) + per-channel params (1, Ct, 1|2)
# ---------------------------------------------------------------------------
def _fwa_affine_kernel(ss_ref, x_ref, o_ref):
    # ss block is (1, ct, 2) f32: [..., 0] = 1+gamma, [..., 1] = beta.
    scale = ss_ref[:, :, 0:1]                       # (1, ct, 1), broadcasts over lanes
    shift = ss_ref[:, :, 1:2]
    o_ref[...] = (scale * x_ref[...] + shift).astype(o_ref.dtype)


def _fwa_shift_kernel(shift_ref, x_ref, o_ref):
    o_ref[...] = (x_ref[...] + shift_ref[...]).astype(o_ref.dtype)


# ---------------------------------------------------------------------------
# Device-aware tuning (block-size target & scoped-VMEM limit)
# ---------------------------------------------------------------------------
def _device_tuning():
    """Returns (target block bytes, vmem_limit_bytes or None) for the local TPU."""
    try:
        kind = jax.devices()[0].device_kind.lower()
    except Exception:  # pragma: no cover - detection is best-effort
        kind = ""
    if "v7" in kind:
        # ~3.2 TB/s HBM but only 64 MiB physical VMEM: larger blocks + explicit
        # scoped limit (6 MiB * 2 streams * 2 buffers = 24 MiB < 48 MiB < 64 MiB).
        return 6 * 1024 * 1024, 48 * 1024 * 1024
    if "v6" in kind:
        # 32 MiB default scoped VMEM; 4 MiB blocks double-buffered fit with room.
        return 4 * 1024 * 1024, None
    # v5e (16 MiB default scoped VMEM, ~820 GB/s) or unknown: stay conservative.
    return 2 * 1024 * 1024, None


# ---------------------------------------------------------------------------
# Tile-size selection (dtype-aware sublanes, capped against target_bytes)
# ---------------------------------------------------------------------------
def _pick_tiles(c, hw, itemsize, target_bytes):
    """Pick (channel_tile, lane_tile) for a (1, ct, lt) block of ~target_bytes."""
    sub = max(8, 32 // itemsize)          # sublane multiple: 8 f32 / 16 bf16 / 32 i8

    # Minimum channel rows every block must carry (full extent if C not tileable).
    min_ct = c if c % sub != 0 else sub

    # Lane tile: multiple of 128 dividing hw (or forced full extent), capped so
    # that even the minimum channel slab stays within the byte target.
    if hw % 128 != 0:
        lt = hw                            # full extent (legal: equals array dim)
    else:
        cap = max(128, (target_bytes // (min_ct * itemsize)) // 128 * 128)
        lt = min(hw, cap)
        while hw % lt != 0:
            lt -= 128

    # Channel tile: multiple of `sub` dividing c (or forced full extent),
    # filling the block up to ~target_bytes.
    if c % sub != 0:
        ct = c                             # full extent (legal: equals array dim)
    else:
        max_ct = max(sub, (target_bytes // (lt * itemsize)) // sub * sub)
        ct = min(c, max_ct)
        while c % ct != 0:
            ct -= sub

    return ct, lt


# ---------------------------------------------------------------------------
# Wrapper
# ---------------------------------------------------------------------------
def feature_wise_affine(x, noise_embed, weight, bias, *, use_affine_level=False,
                        min_pallas_bytes=4 * 1024 * 1024):
    """x: (B, C, H, W); noise_embed: (B, C_in).

    weight: (C_in, C*(1+affine))  -- already transposed vs. torch Linear.
    bias:   (C*(1+affine),)
    """
    B, C, H, W = x.shape
    out_dim = weight.shape[1]
    assert out_dim == C * (1 + int(use_affine_level))
    HW = H * W
    itemsize = x.dtype.itemsize

    # --- tiny Linear hoisted out of the kernel; params kept in f32 -----------
    y = (noise_embed @ weight + bias).astype(jnp.float32)        # (B, out_dim)
    if use_affine_level:
        scale = 1.0 + y[:, :C]                                   # (B, C) f32
        shift = y[:, C:]                                         # (B, C) f32
    else:
        scale = None
        shift = y                                                # (B, C) f32

    target_bytes, vmem_limit = _device_tuning()
    ct, lt = _pick_tiles(C, HW, itemsize, target_bytes)
    block_bytes = ct * lt * itemsize

    # --- plain-jnp fallback ---------------------------------------------------
    # (a) HW < 128: lane axis under-filled -> every store is a masked vst.msk;
    # (b) tiny tensors: per-call/per-step overhead dominates, XLA fuses fine;
    # (c) odd shapes whose forced full-extent block exceeds the VMEM budget.
    if (HW < 128
            or B * C * HW * itemsize < min_pallas_bytes
            or block_bytes > 2 * target_bytes):
        s = shift.reshape(B, C, 1, 1)
        if use_affine_level:
            out = scale.reshape(B, C, 1, 1) * x + s
        else:
            out = x + s
        return out.astype(x.dtype)

    # --- Pallas streaming path --------------------------------------------------
    x_flat = x.reshape(B, C, HW)
    grid = (B, C // ct, HW // lt)

    xy_spec = pl.BlockSpec((1, ct, lt), lambda b, ci, li: (b, ci, li))

    if use_affine_level:
        ss = jnp.stack([scale, shift], axis=-1)                  # (B, C, 2) f32
        kernel = _fwa_affine_kernel
        inputs = (ss, x_flat)
        in_specs = [pl.BlockSpec((1, ct, 2), lambda b, ci, li: (b, ci, 0)),
                    xy_spec]
    else:
        kernel = _fwa_shift_kernel
        inputs = (shift.reshape(B, C, 1), x_flat)
        in_specs = [pl.BlockSpec((1, ct, 1), lambda b, ci, li: (b, ci, 0)),
                    xy_spec]

    out_flat = pl.pallas_call(
        kernel,
        out_shape=jax.ShapeDtypeStruct((B, C, HW), x.dtype),
        grid_spec=pltpu.PrefetchScalarGridSpec(
            num_scalar_prefetch=0,
            grid=grid,
            in_specs=in_specs,
            out_specs=xy_spec,
        ),
        # x block maps to the same-index output block: safe in-place streaming,
        # avoids allocating a second B*C*HW HBM buffer for the result.
        input_output_aliases={1: 0},
        compiler_params=pltpu.CompilerParams(
            dimension_semantics=("parallel", "parallel", "parallel"),
            vmem_limit_bytes=vmem_limit),
    )(*inputs)

    return out_flat.reshape(B, C, H, W)


# ---------------------------------------------------------------------------
# Pure-JAX reference
# ---------------------------------------------------------------------------
def _reference(x, noise_embed, weight, bias, *, use_affine_level=False):
    B, C, H, W = x.shape
    y = noise_embed @ weight + bias
    if use_affine_level:
        gamma = y[:, :C].reshape(B, C, 1, 1)
        beta = y[:, C:].reshape(B, C, 1, 1)
        return (1.0 + gamma) * x + beta
    return x + y.reshape(B, C, 1, 1)


if __name__ == "__main__":
    B, C_in, C_out, H, W = 2, 32, 4, 16, 16

    key = jax.random.PRNGKey(0)
    k_x, k_n, k_w0, k_b0, k_w1, k_b1 = jax.random.split(key, 6)

    x = jax.random.normal(k_x, (B, C_out, H, W), dtype=jnp.float32)
    noise_embed = jax.random.normal(k_n, (B, C_in), dtype=jnp.float32)

    bound = 1.0 / (C_in ** 0.5)  # torch.nn.Linear default init range

    # ---- use_affine_level = False (default path) ----
    w0 = jax.random.uniform(k_w0, (C_in, C_out), jnp.float32, -bound, bound)
    b0 = jax.random.uniform(k_b0, (C_out,), jnp.float32, -bound, bound)
    # min_pallas_bytes=0 forces the Pallas path even at this small demo size.
    out0 = feature_wise_affine(x, noise_embed, w0, b0,
                               use_affine_level=False, min_pallas_bytes=0)
    jax.block_until_ready(out0)
    ref0 = _reference(x, noise_embed, w0, b0, use_affine_level=False)
    assert jnp.allclose(out0, ref0, atol=1e-5, rtol=1e-5)

    # ---- use_affine_level = True (gamma/beta path) ----
    w1 = jax.random.uniform(k_w1, (C_in, 2 * C_out), jnp.float32, -bound, bound)
    b1 = jax.random.uniform(k_b1, (2 * C_out,), jnp.float32, -bound, bound)
    out1 = feature_wise_affine(x, noise_embed, w1, b1,
                               use_affine_level=True, min_pallas_bytes=0)
    jax.block_until_ready(out1)
    ref1 = _reference(x, noise_embed, w1, b1, use_affine_level=True)
    assert jnp.allclose(out1, ref1, atol=1e-5, rtol=1e-5)

    # ---- default heuristics (tiny tensor -> plain-jnp fallback path) ----
    out2 = feature_wise_affine(x, noise_embed, w1, b1, use_affine_level=True)
    jax.block_until_ready(out2)
    assert jnp.allclose(out2, ref1, atol=1e-5, rtol=1e-5)

    print("KERNEL_OK")
</pallas_src>

<mosaic_0001>
module attributes {stable_mosaic.version = 11 : i64} {
  func.func @_fwa_shift_kernel(%arg0: i32, %arg1: i32, %arg2: i32, %arg3: memref<1x4x1xf32, #tpu.memory_space<vmem>>, %arg4: memref<1x4x256xf32, #tpu.memory_space<vmem>>, %arg5: memref<1x4x256xf32, #tpu.memory_space<vmem>>) attributes {dimension_semantics = [#tpu.dimension_semantics<parallel>, #tpu.dimension_semantics<parallel>, #tpu.dimension_semantics<parallel>], iteration_bounds = array<i64: 2, 1, 1>, scalar_prefetch = 0 : i64, scratch_operands = 0 : i64, tpu.core_type = #tpu.core_type<tc>, window_params = [{transform_indices = @transform_0, window_bounds = array<i64: 1, 4, 1>}, {transform_indices = @transform_1, window_bounds = array<i64: 1, 4, 256>}, {transform_indices = @transform_2, window_bounds = array<i64: 1, 4, 256>}]} {
    %c0 = arith.constant 0 : index
    %c0_0 = arith.constant 0 : index
    %c0_1 = arith.constant 0 : index
    %0 = vector.load %arg4[%c0, %c0_0, %c0_1] : memref<1x4x256xf32, #tpu.memory_space<vmem>>, vector<1x4x256xf32>
    %c0_2 = arith.constant 0 : index
    %c0_3 = arith.constant 0 : index
    %c0_4 = arith.constant 0 : index
    %1 = vector.load %arg3[%c0_2, %c0_3, %c0_4] : memref<1x4x1xf32, #tpu.memory_space<vmem>>, vector<1x4x1xf32>
    %2 = vector.broadcast %1 : vector<1x4x1xf32> to vector<1x4x256xf32>
    %3 = arith.addf %0, %2 : vector<1x4x256xf32>
    %c0_5 = arith.constant 0 : index
    %c0_6 = arith.constant 0 : index
    %c0_7 = arith.constant 0 : index
    %4 = vector.load %arg5[%c0_5, %c0_6, %c0_7] : memref<1x4x256xf32, #tpu.memory_space<vmem>>, vector<1x4x256xf32>
    tpu.vector_store %arg5[%c0_5, %c0_6, %c0_7], %3 {strides = array<i32>} : memref<1x4x256xf32, #tpu.memory_space<vmem>>, vector<1x4x256xf32>,
    return
  }
  func.func @transform_0(%arg0: i32, %arg1: i32, %arg2: i32) -> (i32, i32, i32) {
    %c0_i32 = arith.constant 0 : i32
    %c0_i32_0 = arith.constant 0 : i32
    return %arg0, %arg1, %c0_i32 : i32, i32, i32
  }
  func.func @transform_1(%arg0: i32, %arg1: i32, %arg2: i32) -> (i32, i32, i32) {
    %c0_i32 = arith.constant 0 : i32
    return %arg0, %arg1, %arg2 : i32, i32, i32
  }
  func.func @transform_2(%arg0: i32, %arg1: i32, %arg2: i32) -> (i32, i32, i32) {
    %c0_i32 = arith.constant 0 : i32
    return %arg0, %arg1, %arg2 : i32, i32, i32
  }
}

</mosaic_0001>

<llo_original>
// kernel: tpu_custom_call.1
$region0: #{tpu_custom_call.1}
  #allocation0 [shape = 'u32[]', space=smem, size = 0x4, offset = 0x4, fixed_abs, tag = 'smem constant byte address 0x4 - core index']
  #allocation1 [shape = 'u32[144,128]{1,0:T(1,128)}', space=vmem, size = 0x12000, scoped, tag = 'internal scratch']
  %s0 = inlined_call_operand.vmem [shape: f32[2,4,1], index: 0, kind: input, shape index: {}]
  %s1 = inlined_call_operand.hbm [shape: f32[2,4,256], index: 1, kind: input, shape index: {}, may-alias: {1,2}]
  %s2 = inlined_call_operand.hbm [shape: f32[2,4,256], index: 2, kind: output, shape index: {}, may-alias: {1,2}]
  %s3 = sld [smem:[#allocation0]]
  $region45: #{tpu_custom_call.1} parent=0
    _
  %s5 = ssub.s32 1, %s3
  %s6 = scalar_select 0, %s5, %s3
  $region1: #{tpu_custom_call.1} parent=0
    #allocation2 [shape = 'u8[8192]{0}', space=vmem, size = 0x2000, scoped, tag = 'input window, operand 1']
    #allocation3 [shape = 's32[2]{0}', space=sflag, size = 0x8, scoped, tag = 'scoped memory for tpu_custom_call.1']
    #allocation4 [shape = 's32[2]{0}', space=sflag, size = 0x8, scoped, tag = 'scoped memory for tpu_custom_call.1']
    #allocation5 [shape = 'u8[8192]{0}', space=vmem, size = 0x2000, scoped, tag = 'output window, operand 0']
    %7 = vsyncpa [#allocation3], 0
    %s8 = scalar_lea.sflag [#allocation3], 1
    %9 = vsyncpa %s8, 0
    %10 = vsyncpa [#allocation4], 0
    %s11 = scalar_lea.sflag [#allocation4], 1
    %12 = vsyncpa %s11, 0
    loop: start=0, step=1, limit=4
    $region2: #{tpu_custom_call.1} parent=1 // loop_pre_header
      _
    $region3: #{tpu_custom_call.1} parent=1 // loop_header
      %s14 = sphi 0, %s18
      %p15 = scmp.ge.s32.totalorder %s14, 4
      %s21 = sphi 0, %s40
      %s22 = sphi 0, %s36
      %s23 = sphi 0, %s32
      %s24 = sphi 0, %s21
      %s25 = sphi 0, %s22
      %s26 = sphi 0, %s23
      %s27 = sphi 0, %s24
      %s28 = sphi 0, %s25
      %s29 = sphi 0, %s26
      %s45 = sphi 0, %s47
      %s48 = sphi 0, %s45
      %s49 = sphi 0, %s48
      %s65 = sphi 0, %s49
      %s75 = sphi 0, %s77
      %s78 = sphi 0, %s75
      %s79 = sphi 0, %s78
      %s95 = sphi 0, %s79
      %s105 = sphi 0, %s107
      %s108 = sphi 0, %s105
      %s109 = sphi 0, %s108
      %s125 = sphi 0, %s109
    $region4: #{tpu_custom_call.1} parent=1 // loop_header_branch
      %17 = sbr.rel (%p15) target = $region8
    $region5: #{tpu_custom_call.1} parent=1 // loop_body
      %s19 = ssub.s32 %s14, 1
      %s20 = ssub.s32 %s14, 2
      %s30 = sadd.s32 1, %s23
      %p31 = scmp.ge.s32.totalorder %s30, 1
      %s32 = scalar_select %p31, 0, %s30
      %s33 = sadd.s32 1, %s22
      %s34 = scalar_select %p31, %s33, %s22
      %p35 = scmp.ge.s32.totalorder %s34, 1
      %s36 = scalar_select %p35, 0, %s34
      %s37 = sadd.s32 1, %s21
      %s38 = scalar_select %p35, %s37, %s21
      %p39 = scmp.ge.s32.totalorder %s38, 2
      %s40 = scalar_select %p39, 0, %s38
      %s41 = ssub.s32 %s21, %s40
      %s42 = ssub.s32 %s22, %s36
      %s43 = sor.u32 %s41, %s42
      %p44 = scmp.eq.s32.totalorder %s43, 0
      %s46 = sadd.s32 %s45, 1
      %s47 = scalar_select %p44, %s45, %s46
      %p50 = pneg %p44
      %p51 = scmp.eq.s32.totalorder %s14, 1
      %p52 = por %p50, %p51
      %p53 = scmp.ne.s32.totalorder %s45, %s48
      %p54 = scmp.eq.s32.totalorder %s14, 0
      %p55 = por %p53, %p54
      %p56 = scmp.ne.s32.totalorder %s45, %s48
      %p57 = scmp.eq.s32.totalorder %s19, 1
      %p58 = por %p56, %p57
      %p59 = scmp.ne.s32.totalorder %s48, %s49
      %p60 = scmp.eq.s32.totalorder %s19, 0
      %p61 = por %p59, %p60
      %p62 = scmp.ne.s32.totalorder %s48, %s49
      %p63 = scmp.eq.s32.totalorder %s20, 1
      %p64 = por %p62, %p63
      %p66 = scmp.ne.s32.totalorder %s49, %s65
      %p67 = scmp.eq.s32.totalorder %s20, 0
      %p68 = por %p66, %p67
      %s69 = ssub.s32 %s21, %s40
      %s70 = ssub.s32 %s22, %s36
      %s71 = sor.u32 %s69, %s70
      %s72 = ssub.s32 %s23, %s32
      %s73 = sor.u32 %s71, %s72
      %p74 = scmp.eq.s32.totalorder %s73, 0
      %s76 = sadd.s32 %s75, 1
      %s77 = scalar_select %p74, %s75, %s76
      %p80 = pneg %p74
      %p81 = scmp.eq.s32.totalorder %s14, 1
      %p82 = por %p80, %p81
      %p83 = scmp.ne.s32.totalorder %s75, %s78
      %p84 = scmp.eq.s32.totalorder %s14, 0
      %p85 = por %p83, %p84
      %p86 = scmp.ne.s32.totalorder %s75, %s78
      %p87 = scmp.eq.s32.totalorder %s19, 1
      %p88 = por %p86, %p87
      %p89 = scmp.ne.s32.totalorder %s78, %s79
      %p90 = scmp.eq.s32.totalorder %s19, 0
      %p91 = por %p89, %p90
      %p92 = scmp.ne.s32.totalorder %s78, %s79
      %p93 = scmp.eq.s32.totalorder %s20, 1
      %p94 = por %p92, %p93
      %p96 = scmp.ne.s32.totalorder %s79, %s95
      %p97 = scmp.eq.s32.totalorder %s20, 0
      %p98 = por %p96, %p97
      %s99 = ssub.s32 %s21, %s40
      %s100 = ssub.s32 %s22, %s36
      %s101 = sor.u32 %s99, %s100
      %s102 = ssub.s32 %s23, %s32
      %s103 = sor.u32 %s101, %s102
      %p104 = scmp.eq.s32.totalorder %s103, 0
      %s106 = sadd.s32 %s105, 1
      %s107 = scalar_select %p104, %s105, %s106
      %p110 = pneg %p104
      %p111 = scmp.eq.s32.totalorder %s14, 1
      %p112 = por %p110, %p111
      %p113 = scmp.ne.s32.totalorder %s105, %s108
      %p114 = scmp.eq.s32.totalorder %s14, 0
      %p115 = por %p113, %p114
      %p116 = scmp.ne.s32.totalorder %s105, %s108
      %p117 = scmp.eq.s32.totalorder %s19, 1
      %p118 = por %p116, %p117
      %p119 = scmp.ne.s32.totalorder %s108, %s109
      %p120 = scmp.eq.s32.totalorder %s19, 0
      %p121 = por %p119, %p120
      %p122 = scmp.ne.s32.totalorder %s108, %s109
      %p123 = scmp.eq.s32.totalorder %s20, 1
      %p124 = por %p122, %p123
      %p126 = scmp.ne.s32.totalorder %s109, %s125
      %p127 = scmp.eq.s32.totalorder %s20, 0
      %p128 = por %p126, %p127
      %p129 = scmp.le.s32.totalorder 1, %s14
      %p130 = scmp.lt.s32.totalorder %s14, 3
      %p131 = pnand %p129, %p130
      %p132 = pneg %p131
      // Predicated region
      $region9: #{tpu_custom_call.1} parent=5 // pred_check
        _
      $region10: #{tpu_custom_call.1} parent=5 // pred_check_branch
        %134 = sbr.rel (%p131) target = $region12
      $region11: #{tpu_custom_call.1} parent=5 // pred_region
        %s135 = ssub.s32 %s14, 1
      $region12: #{tpu_custom_call.1} parent=5 // pred_fallthru
        _
      %p136 = scmp.lt.s32.totalorder %s14, 2
      // Predicated region
      $region13: #{tpu_custom_call.1} parent=5 // pred_check
        %p137 = pneg %p136
      $region14: #{tpu_custom_call.1} parent=5 // pred_check_branch
        %139 = sbr.rel (%p137) target = $region16
      $region15: #{tpu_custom_call.1} parent=5 // pred_region
        // Predicated region
        $region17: #{tpu_custom_call.1} parent=15 // pred_check
          %p140 = pneg %p55
        $region18: #{tpu_custom_call.1} parent=15 // pred_check_branch
          %142 = sbr.rel (%p140) target = $region20
        $region19: #{tpu_custom_call.1} parent=15 // pred_region
          %p143 = scmp.lt.s32.totalorder %s21, 1
          %s144 = scalar_select %p143, %s21, 1
          %p145 = scmp.lt.s32.totalorder %s22, 0
          %s146 = scalar_select %p145, %s22, 0
          %s147 = sadd.s32 %s146, %s144
          %s148 = smul.addr %s147, 4
          %s149 = scalar_lea.vmem %s0, %s148
        $region20: #{tpu_custom_call.1} parent=15 // pred_fallthru
          _
        // Predicated region
        $region21: #{tpu_custom_call.1} parent=15 // pred_check
          %p150 = pneg %p85
        $region22: #{tpu_custom_call.1} parent=15 // pred_check_branch
          %152 = sbr.rel (%p150) target = $region24
        $region23: #{tpu_custom_call.1} parent=15 // pred_region
          %s153 = sand.u32 %s75, 1
          %s154 = scalar_lea.sflag [#allocation3], %s153
          %s155 = sand.u32 %s75, 1
          %s156 = smul.addr %s155, 8
          %s157 = scalar_lea.vmem [#allocation2], %s156
          %s158 = smul.u32 2, %s23
          %s160 = ssub.s32 128, 128
          %161 = vsyncadd %s154, %s160
          %s162 = smul.addr %s22, 2
          %s163 = sadd.s32 %s158, %s162
          %s164 = smul.addr %s21, 2
          %s165 = sadd.s32 %s163, %s164
          %s166 = smul.addr %s165, 64
          %s167 = scalar_lea.hbm %s1, %s166
          %s169 = sshll.u32 %s157, 4
          %s170 = int_to_ptr.vmem [resolvable:$true] %s169
          %172 = dma.hbm_to_vmem [thread:$0]  %s167, 128, %s170, %s154
        $region24: #{tpu_custom_call.1} parent=15 // pred_fallthru
          _
      $region16: #{tpu_custom_call.1} parent=5 // pred_fallthru
        _
      %p173 = scmp.le.s32.totalorder 1, %s14
      %p174 = scmp.lt.s32.totalorder %s14, 3
      %p175 = pnand %p173, %p174
      %p176 = pneg %p175
      // Predicated region
      $region25: #{tpu_custom_call.1} parent=5 // pred_check
        _
      $region26: #{tpu_custom_call.1} parent=5 // pred_check_branch
        %178 = sbr.rel (%p175) target = $region28
      $region27: #{tpu_custom_call.1} parent=5 // pred_region
        %s179 = ssub.s32 %s14, 1
        %s180 = sand.u32 %s78, 1
        %s181 = scalar_lea.sflag [#allocation3], %s180
        %s182 = sand.u32 %s78, 1
        %s183 = smul.addr %s182, 8
        %s184 = scalar_lea.vmem [#allocation2], %s183
        // Predicated region
        $region29: #{tpu_custom_call.1} parent=27 // pred_check
          %p185 = pneg %p91
        $region30: #{tpu_custom_call.1} parent=27 // pred_check_branch
          %187 = sbr.rel (%p185) target = $region32
        $region31: #{tpu_custom_call.1} parent=27 // pred_region
          %188 = dma.done %s181, 128
        $region32: #{tpu_custom_call.1} parent=27 // pred_fallthru
          _
        %p189 = scmp.lt.s32.totalorder %s24, 1
        %s190 = scalar_select %p189, %s24, 1
        %p191 = scmp.lt.s32.totalorder %s25, 0
        %s192 = scalar_select %p191, %s25, 0
        %s193 = sadd.s32 %s192, %s190
        %s194 = smul.addr %s193, 4
        %s195 = scalar_lea.vmem %s0, %s194
        %p196 = pneg %p61
        %p197 = pneg %p58
        %s198 = sand.u32 %s78, 1
        %s199 = scalar_lea.sflag [#allocation3], %s198
        %s200 = sand.u32 %s78, 1
        %s201 = smul.addr %s200, 8
        %s202 = scalar_lea.vmem [#allocation2], %s201
        %p203 = pneg %p91
        %p204 = pneg %p88
        %p205 = pneg %p121
        %p206 = pneg %p118
        %s207 = sand.u32 %s108, 1
        %s208 = scalar_lea.sflag [#allocation4], %s207
        %s209 = sand.u32 %s108, 1
        %s210 = smul.addr %s209, 8
        %s211 = scalar_lea.vmem [#allocation5], %s210
        %p212 = scmp.lt.s32.totalorder %s24, 1
        %s213 = scalar_select %p212, %s24, 1
        %p214 = scmp.lt.s32.totalorder %s25, 0
        %s215 = scalar_select %p214, %s25, 0
        %s216 = sadd.s32 %s215, %s213
        %s217 = smul.addr %s216, 4
        %s218 = scalar_lea.vmem %s0, %s217
        %s219 = smul.u32 2, %s26
        %s220 = smul.u32 2, %s26
        %v221 = vld [vmem:[%s184] sm:$0xff]
        %v222 = vld [vmem:[%s218] sm:$0xf]
        %224 = vset.pattern.permute.xlu0 0
        %225 = vperm.xlu0 %224, %v222
        %v226 = vpop.permute.xlu0 %225
        %v228 = vunpack.c.l.s4 839922192
        %v229 = vunpack.c.0.s8 %v228
        %v230 = vlaneseq
        %v231 = vshrl.u32 %v230, 7
        %v232 = vsub.s32 %v229, %v231
        %v233 = vrot.slane %v226, %v232
        %v235 = vadd.f32 %v221, %v233
        %236 = vst [vmem:[%s211] sm:$0xff] %v235
        %s237 = sand.u32 %s108, 1
        %s238 = scalar_lea.sflag [#allocation4], %s237
        %s239 = sand.u32 %s108, 1
        %s240 = smul.addr %s239, 8
        %s241 = scalar_lea.vmem [#allocation5], %s240
        // Predicated region
        $region33: #{tpu_custom_call.1} parent=27 // pred_check
          %p242 = pneg %p118
        $region34: #{tpu_custom_call.1} parent=27 // pred_check_branch
          %244 = sbr.rel (%p242) target = $region36
        $region35: #{tpu_custom_call.1} parent=27 // pred_region
          %s245 = smul.u32 2, %s26
          %s247 = ssub.s32 128, 128
          %248 = vsyncadd %s238, %s247
          %s249 = smul.addr %s25, 2
          %s250 = sadd.s32 %s245, %s249
          %s251 = smul.addr %s24, 2
          %s252 = sadd.s32 %s250, %s251
          %s253 = smul.addr %s252, 64
          %s254 = scalar_lea.hbm %s2, %s253
          %s256 = sshll.u32 %s241, 4
          %s257 = int_to_ptr.vmem [resolvable:$true] %s256
          %259 = dma.vmem_to_hbm [thread:$0]  %s257, 128, %s254, %s238
        $region36: #{tpu_custom_call.1} parent=27 // pred_fallthru
          _
      $region28: #{tpu_custom_call.1} parent=5 // pred_fallthru
        _
      %p260 = scmp.le.s32.totalorder 2, %s14
      // Predicated region
      $region37: #{tpu_custom_call.1} parent=5 // pred_check
        %p261 = pneg %p260
      $region38: #{tpu_custom_call.1} parent=5 // pred_check_branch
        %263 = sbr.rel (%p261) target = $region40
      $region39: #{tpu_custom_call.1} parent=5 // pred_region
        %s264 = ssub.s32 %s14, 2
        // Predicated region
        $region41: #{tpu_custom_call.1} parent=39 // pred_check
          %p265 = pneg %p124
        $region42: #{tpu_custom_call.1} parent=39 // pred_check_branch
          %267 = sbr.rel (%p265) target = $region44
        $region43: #{tpu_custom_call.1} parent=39 // pred_region
          %s268 = sand.u32 %s109, 1
          %s269 = scalar_lea.sflag [#allocation4], %s268
          %s270 = sand.u32 %s109, 1
          %s271 = smul.addr %s270, 8
          %s272 = scalar_lea.vmem [#allocation5], %s271
          %273 = dma.done %s269, 128
        $region44: #{tpu_custom_call.1} parent=39 // pred_fallthru
          _
      $region40: #{tpu_custom_call.1} parent=5 // pred_fallthru
        _
    $region6: #{tpu_custom_call.1} parent=1 // loop_footer
      %s18 = sadd.s32 1, %s14
    $region7: #{tpu_custom_call.1} parent=1 // loop_footer_branch
      %13 = sbr.rel target = $region3
    $region8: #{tpu_custom_call.1} parent=1 // loop_exit
      _
    %274 = vsyncpa [#allocation3], 1
    %s275 = scalar_lea.sflag [#allocation3], 1
    %276 = vsyncpa %s275, 1
    %277 = vsyncpa [#allocation4], 1
    %s278 = scalar_lea.sflag [#allocation4], 1
    %279 = vsyncpa %s278, 1

</llo_original>
